<compile_context>
chip_gen: v7x
topology: tpu7x:2x2x1
jax: 0.10.0
libtpu: 0.0.40
codegen_flags: <defaults>
</compile_context>

<pallas_src>
import jax
import jax.numpy as jnp
from jax.experimental import pallas as pl
from jax.experimental.pallas import tpu as pltpu


def _separate_attention_kernel(
    enc_ref,      # (Bt, S, H)
    enc2_ref,     # (Bt, S, H)
    dec_ref,      # (Bt, H)
    w_att_ref,    # (3H, H)  pre-transposed linear_att weight (right-multiply form)
    b_att_ref,    # (1, H)
    w_out_ref,    # (H, O)
    b_out_ref,    # (1, O)
    out_ref,      # (Bt, O)
):
    enc = enc_ref[...]           # (Bt, S, H)
    enc2 = enc2_ref[...]         # (Bt, S, H)
    dec = dec_ref[...]           # (Bt, H)
    bt, _, h = enc.shape

    # Hoisted once (used by both attention passes): dec as a (Bt, 1, H) "query" tile.
    dec_q = dec.reshape(bt, 1, h)

    def attend(keys):
        # scores[b, 1, s] = sum_h dec[b, h] * keys[b, s, h]   -- MXU batched matmul
        scores = jnp.einsum("bqh,bsh->bqs", dec_q, keys,
                            preferred_element_type=jnp.float32)      # (Bt, 1, S)
        # softmax over S (torch dim=1), f32 statistics
        m = jnp.max(scores, axis=-1, keepdims=True)
        e = jnp.exp(scores - m)
        denom = jnp.sum(e, axis=-1, keepdims=True)
        attn = (e * pl.reciprocal(denom, approx=True)).astype(keys.dtype)
        # ctx[b, 1, h] = sum_s attn[b, 1, s] * keys[b, s, h]   -- MXU batched matmul
        ctx = jnp.einsum("bqs,bsh->bqh", attn, keys,
                         preferred_element_type=jnp.float32)         # (Bt, 1, H)
        return ctx.reshape(bt, h)

    ctx1 = attend(enc)    # (Bt, H) f32
    ctx2 = attend(enc2)   # (Bt, H) f32

    # linear_att(cat([ctx1, ctx2, dec], 1)) as ONE K=3H MXU contraction.
    cat = jnp.concatenate([ctx1, ctx2, dec.astype(ctx1.dtype)], axis=1)   # (Bt, 3H)
    hid = jnp.tanh(
        jnp.dot(cat, w_att_ref[...], preferred_element_type=jnp.float32)
        + b_att_ref[...]
    )                                                                     # (Bt, H)

    # dropout is identity in eval mode (no RNG applied).
    h2y = (
        jnp.dot(hid.astype(w_out_ref.dtype), w_out_ref[...],
                preferred_element_type=jnp.float32)
        + b_out_ref[...]
    )                                                                     # (Bt, O)

    # log_softmax over dim=1 (output classes)
    m2 = jnp.max(h2y, axis=1, keepdims=True)
    shifted = h2y - m2
    lse = jnp.log(jnp.sum(jnp.exp(shifted), axis=1, keepdims=True))
    out_ref[...] = (shifted - lse).astype(out_ref.dtype)


def prepare_params(params):
    """One-time parameter prep (outside the per-call path): pre-transpose linear_att."""
    H = params["b_att"].shape[0]
    O = params["b_out"].shape[0]
    return {
        "w_att_t": jnp.transpose(params["w_att"]),   # (3H, H) right-multiply form
        "b_att": params["b_att"].reshape(1, H),
        "w_out": params["w_out"],                    # (H, O) already right-multiply form
        "b_out": params["b_out"].reshape(1, O),
    }


def separate_attention_forward(enc_s_top, dec_s_top, enc_2, prepped, *, block_b=None):
    """enc_s_top/enc_2: (B,S,H), dec_s_top: (B,H). `prepped` from prepare_params()."""
    B, S, H = enc_s_top.shape
    O = prepped["w_out"].shape[1]

    if block_b is None:
        if B <= 8:
            block_b = B          # block equals full batch dim (satisfies tiling rule)
        else:
            # Cap the per-step enc+enc2 working set (x2 for double buffering) so the
            # tile also fits comfortably on v7x (64 MiB VMEM / 32 MiB scoped default).
            bytes_per_row = 2 * S * H * jnp.dtype(enc_s_top.dtype).itemsize
            budget = 8 * 1024 * 1024
            cand = max(8, min(128, budget // max(1, bytes_per_row)))
            block_b = int(max(8, (cand // 8) * 8))   # multiple of 8 (sublane rule)

    grid = (pl.cdiv(B, block_b),)

    in_specs = [
        pl.BlockSpec((block_b, S, H), lambda b: (b, 0, 0)),   # enc_s_top
        pl.BlockSpec((block_b, S, H), lambda b: (b, 0, 0)),   # enc_2
        pl.BlockSpec((block_b, H),    lambda b: (b, 0)),      # dec_s_top
        pl.BlockSpec((3 * H, H),      lambda b: (0, 0)),      # w_att_t  (resident)
        pl.BlockSpec((1, H),          lambda b: (0, 0)),      # b_att    (resident)
        pl.BlockSpec((H, O),          lambda b: (0, 0)),      # w_out    (resident)
        pl.BlockSpec((1, O),          lambda b: (0, 0)),      # b_out    (resident)
    ]
    out_spec = pl.BlockSpec((block_b, O), lambda b: (b, 0))

    return pl.pallas_call(
        _separate_attention_kernel,
        out_shape=jax.ShapeDtypeStruct((B, O), jnp.float32),
        grid=grid,
        in_specs=in_specs,
        out_specs=out_spec,
        compiler_params=pltpu.CompilerParams(
            dimension_semantics=("parallel",),     # batch axis: megacore / 2-TC sharding
            vmem_limit_bytes=32 * 1024 * 1024,
        ),
    )(enc_s_top, enc_2, dec_s_top,
      prepped["w_att_t"], prepped["b_att"], prepped["w_out"], prepped["b_out"])


def _reference(enc_s_top, dec_s_top, enc_2, params):
    """Pure-JAX reference mirroring the PyTorch forward (eval mode)."""
    scores1 = jnp.einsum("bsh,bh->bs", enc_s_top, dec_s_top)
    attn1 = jax.nn.softmax(scores1, axis=1)
    ctx1 = jnp.einsum("bs,bsh->bh", attn1, enc_s_top)
    scores2 = jnp.einsum("bsh,bh->bs", enc_2, dec_s_top)
    attn2 = jax.nn.softmax(scores2, axis=1)
    ctx2 = jnp.einsum("bs,bsh->bh", attn2, enc_2)
    cat = jnp.concatenate([ctx1, ctx2, dec_s_top], axis=1)          # (B, 3H)
    hid = jnp.tanh(cat @ params["w_att"].T + params["b_att"])       # (B, H)
    h2y = hid @ params["w_out"] + params["b_out"]                   # (B, O)
    return jax.nn.log_softmax(h2y, axis=1)


if __name__ == "__main__":
    B, S, H, O = 2, 8, 32, 16

    key = jax.random.PRNGKey(0)
    k_enc, k_enc2, k_dec, k_wa, k_ba, k_wo, k_bo = jax.random.split(key, 7)

    enc_s_top = jax.random.normal(k_enc, (B, S, H), dtype=jnp.float32)
    enc_2 = jax.random.normal(k_enc2, (B, S, H), dtype=jnp.float32)
    dec_s_top = jax.random.normal(k_dec, (B, H), dtype=jnp.float32)

    # Deterministic parameter init (PyTorch Linear-style uniform bounds).
    lim_att = 1.0 / jnp.sqrt(3.0 * H)
    lim_out = 1.0 / jnp.sqrt(1.0 * H)
    params = {
        # linear_att: PyTorch weight shape (out=H, in=3H), bias (H,)
        "w_att": jax.random.uniform(k_wa, (H, 3 * H), jnp.float32, -lim_att, lim_att),
        "b_att": jax.random.uniform(k_ba, (H,), jnp.float32, -lim_att, lim_att),
        # linear_out stored in right-multiply form (H, O); bias (O,)
        "w_out": jax.random.uniform(k_wo, (H, O), jnp.float32, -lim_out, lim_out),
        "b_out": jax.random.uniform(k_bo, (O,), jnp.float32, -lim_out, lim_out),
    }

    prepped = prepare_params(params)   # one-time weight prep (pre-transpose / reshape)

    pred = separate_attention_forward(enc_s_top, dec_s_top, enc_2, prepped)
    pred = jax.block_until_ready(pred)

    ref = _reference(enc_s_top, dec_s_top, enc_2, params)
    assert pred.shape == (B, O)
    max_err = float(jnp.max(jnp.abs(pred - ref)))
    # Tolerance relaxed slightly vs. 1e-5 because the softmax denominator uses the
    # EUP approximate reciprocal (pl.reciprocal(approx=True)); error stays ~1e-4.
    assert jnp.allclose(pred, ref, atol=2e-3, rtol=1e-3), f"mismatch: max abs err {max_err}"
    print("KERNEL_OK")
</pallas_src>

<mosaic_0001>
module attributes {stable_mosaic.version = 11 : i64} {
  func.func @_separate_attention_kernel(%arg0: i32, %arg1: memref<2x8x32xf32, #tpu.memory_space<vmem>>, %arg2: memref<2x8x32xf32, #tpu.memory_space<vmem>>, %arg3: memref<2x32xf32, #tpu.memory_space<vmem>>, %arg4: memref<96x32xf32, #tpu.memory_space<vmem>>, %arg5: memref<1x32xf32, #tpu.memory_space<vmem>>, %arg6: memref<32x16xf32, #tpu.memory_space<vmem>>, %arg7: memref<1x16xf32, #tpu.memory_space<vmem>>, %arg8: memref<2x16xf32, #tpu.memory_space<vmem>>) attributes {dimension_semantics = [#tpu.dimension_semantics<parallel>], iteration_bounds = array<i64: 1>, scalar_prefetch = 0 : i64, scratch_operands = 0 : i64, tpu.core_type = #tpu.core_type<tc>, window_params = [{transform_indices = @transform_0, window_bounds = array<i64: 2, 8, 32>}, {transform_indices = @transform_1, window_bounds = array<i64: 2, 8, 32>}, {transform_indices = @transform_2, window_bounds = array<i64: 2, 32>}, {pipeline_mode = #tpu.pipeline_mode<synchronous>, transform_indices = @transform_3, window_bounds = array<i64: 96, 32>}, {pipeline_mode = #tpu.pipeline_mode<synchronous>, transform_indices = @transform_4, window_bounds = array<i64: 1, 32>}, {pipeline_mode = #tpu.pipeline_mode<synchronous>, transform_indices = @transform_5, window_bounds = array<i64: 32, 16>}, {pipeline_mode = #tpu.pipeline_mode<synchronous>, transform_indices = @transform_6, window_bounds = array<i64: 1, 16>}, {transform_indices = @transform_7, window_bounds = array<i64: 2, 16>}]} {
    %c0 = arith.constant 0 : index
    %c0_0 = arith.constant 0 : index
    %c0_1 = arith.constant 0 : index
    %0 = vector.load %arg1[%c0, %c0_0, %c0_1] : memref<2x8x32xf32, #tpu.memory_space<vmem>>, vector<2x8x32xf32>
    %c0_2 = arith.constant 0 : index
    %c0_3 = arith.constant 0 : index
    %c0_4 = arith.constant 0 : index
    %1 = vector.load %arg2[%c0_2, %c0_3, %c0_4] : memref<2x8x32xf32, #tpu.memory_space<vmem>>, vector<2x8x32xf32>
    %c0_5 = arith.constant 0 : index
    %c0_6 = arith.constant 0 : index
    %2 = vector.load %arg3[%c0_5, %c0_6] : memref<2x32xf32, #tpu.memory_space<vmem>>, vector<2x32xf32>
    %3 = vector.shape_cast %2 : vector<2x32xf32> to vector<2x1x32xf32>
    "tpu.trace_start"() <{level = 10 : i32, message = "bqh,bsh->bqs"}> : () -> ()
    %cst = arith.constant dense<0.000000e+00> : vector<2x1x8xf32>
    %4 = tpu.matmul %3, %0, %cst {dimension_numbers = #tpu.dot_dimension_numbers<[2], [2], [1], [1], [0, 0, 0, 1, 1, 1], [0], [0]>} : vector<2x1x32xf32>, vector<2x8x32xf32>, vector<2x1x8xf32> -> vector<2x1x8xf32>
    "tpu.trace_stop"() : () -> ()
    %cst_7 = arith.constant dense<0xFF800000> : vector<2x1xf32>
    %5 = vector.multi_reduction <maximumf>, %4, %cst_7 [2] : vector<2x1x8xf32> to vector<2x1xf32>
    %6 = vector.shape_cast %5 : vector<2x1xf32> to vector<2x1x1xf32>
    %7 = vector.broadcast %6 : vector<2x1x1xf32> to vector<2x1x8xf32>
    %8 = arith.subf %4, %7 : vector<2x1x8xf32>
    %9 = math.exp %8 : vector<2x1x8xf32>
    %cst_8 = arith.constant dense<0.000000e+00> : vector<2x1xf32>
    %10 = vector.multi_reduction <add>, %9, %cst_8 [2] : vector<2x1x8xf32> to vector<2x1xf32>
    %11 = vector.shape_cast %10 : vector<2x1xf32> to vector<2x1x1xf32>
    %12 = tpu.reciprocal %11 {approx = true} : vector<2x1x1xf32> -> vector<2x1x1xf32>
    %13 = vector.broadcast %12 : vector<2x1x1xf32> to vector<2x1x8xf32>
    %14 = arith.mulf %9, %13 : vector<2x1x8xf32>
    "tpu.trace_start"() <{level = 10 : i32, message = "bqs,bsh->bqh"}> : () -> ()
    %cst_9 = arith.constant dense<0.000000e+00> : vector<2x1x32xf32>
    %15 = tpu.matmul %14, %0, %cst_9 {dimension_numbers = #tpu.dot_dimension_numbers<[2], [1], [1], [2], [0, 0, 0, 1, 1, 2], [0], [0]>} : vector<2x1x8xf32>, vector<2x8x32xf32>, vector<2x1x32xf32> -> vector<2x1x32xf32>
    "tpu.trace_stop"() : () -> ()
    %16 = vector.shape_cast %15 : vector<2x1x32xf32> to vector<2x32xf32>
    "tpu.trace_start"() <{level = 10 : i32, message = "bqh,bsh->bqs"}> : () -> ()
    %cst_10 = arith.constant dense<0.000000e+00> : vector<2x1x8xf32>
    %17 = tpu.matmul %3, %1, %cst_10 {dimension_numbers = #tpu.dot_dimension_numbers<[2], [2], [1], [1], [0, 0, 0, 1, 1, 1], [0], [0]>} : vector<2x1x32xf32>, vector<2x8x32xf32>, vector<2x1x8xf32> -> vector<2x1x8xf32>
    "tpu.trace_stop"() : () -> ()
    %cst_11 = arith.constant dense<0xFF800000> : vector<2x1xf32>
    %18 = vector.multi_reduction <maximumf>, %17, %cst_11 [2] : vector<2x1x8xf32> to vector<2x1xf32>
    %19 = vector.shape_cast %18 : vector<2x1xf32> to vector<2x1x1xf32>
    %20 = vector.broadcast %19 : vector<2x1x1xf32> to vector<2x1x8xf32>
    %21 = arith.subf %17, %20 : vector<2x1x8xf32>
    %22 = math.exp %21 : vector<2x1x8xf32>
    %cst_12 = arith.constant dense<0.000000e+00> : vector<2x1xf32>
    %23 = vector.multi_reduction <add>, %22, %cst_12 [2] : vector<2x1x8xf32> to vector<2x1xf32>
    %24 = vector.shape_cast %23 : vector<2x1xf32> to vector<2x1x1xf32>
    %25 = tpu.reciprocal %24 {approx = true} : vector<2x1x1xf32> -> vector<2x1x1xf32>
    %26 = vector.broadcast %25 : vector<2x1x1xf32> to vector<2x1x8xf32>
    %27 = arith.mulf %22, %26 : vector<2x1x8xf32>
    "tpu.trace_start"() <{level = 10 : i32, message = "bqs,bsh->bqh"}> : () -> ()
    %cst_13 = arith.constant dense<0.000000e+00> : vector<2x1x32xf32>
    %28 = tpu.matmul %27, %1, %cst_13 {dimension_numbers = #tpu.dot_dimension_numbers<[2], [1], [1], [2], [0, 0, 0, 1, 1, 2], [0], [0]>} : vector<2x1x8xf32>, vector<2x8x32xf32>, vector<2x1x32xf32> -> vector<2x1x32xf32>
    "tpu.trace_stop"() : () -> ()
    %29 = vector.shape_cast %28 : vector<2x1x32xf32> to vector<2x32xf32>
    %30 = tpu.concatenate %16, %29, %2 in 1 : vector<2x32xf32>, vector<2x32xf32>, vector<2x32xf32> -> vector<2x96xf32>
    %c0_14 = arith.constant 0 : index
    %c0_15 = arith.constant 0 : index
    %31 = vector.load %arg4[%c0_14, %c0_15] : memref<96x32xf32, #tpu.memory_space<vmem>>, vector<96x32xf32>
    %cst_16 = arith.constant dense<0.000000e+00> : vector<2x32xf32>
    %32 = tpu.matmul %30, %31, %cst_16 {dimension_numbers = #tpu.dot_dimension_numbers<[1], [0], [0], [1], [0, 0, 1, 1], [], []>} : vector<2x96xf32>, vector<96x32xf32>, vector<2x32xf32> -> vector<2x32xf32>
    %c0_17 = arith.constant 0 : index
    %c0_18 = arith.constant 0 : index
    %33 = vector.load %arg5[%c0_17, %c0_18] : memref<1x32xf32, #tpu.memory_space<vmem>>, vector<1x32xf32>
    %34 = vector.broadcast %33 : vector<1x32xf32> to vector<2x32xf32>
    %35 = arith.addf %32, %34 : vector<2x32xf32>
    %36 = math.tanh %35 : vector<2x32xf32>
    %c0_19 = arith.constant 0 : index
    %c0_20 = arith.constant 0 : index
    %37 = vector.load %arg6[%c0_19, %c0_20] : memref<32x16xf32, #tpu.memory_space<vmem>>, vector<32x16xf32>
    %cst_21 = arith.constant dense<0.000000e+00> : vector<2x16xf32>
    %38 = tpu.matmul %36, %37, %cst_21 {dimension_numbers = #tpu.dot_dimension_numbers<[1], [0], [0], [1], [0, 0, 1, 1], [], []>} : vector<2x32xf32>, vector<32x16xf32>, vector<2x16xf32> -> vector<2x16xf32>
    %c0_22 = arith.constant 0 : index
    %c0_23 = arith.constant 0 : index
    %39 = vector.load %arg7[%c0_22, %c0_23] : memref<1x16xf32, #tpu.memory_space<vmem>>, vector<1x16xf32>
    %40 = vector.broadcast %39 : vector<1x16xf32> to vector<2x16xf32>
    %41 = arith.addf %38, %40 : vector<2x16xf32>
    %cst_24 = arith.constant dense<0xFF800000> : vector<2xf32>
    %42 = vector.multi_reduction <maximumf>, %41, %cst_24 [1] : vector<2x16xf32> to vector<2xf32>
    %43 = vector.shape_cast %42 : vector<2xf32> to vector<2x1xf32>
    %44 = vector.broadcast %43 : vector<2x1xf32> to vector<2x16xf32>
    %45 = arith.subf %41, %44 : vector<2x16xf32>
    %46 = math.exp %45 : vector<2x16xf32>
    %cst_25 = arith.constant dense<0.000000e+00> : vector<2xf32>
    %47 = vector.multi_reduction <add>, %46, %cst_25 [1] : vector<2x16xf32> to vector<2xf32>
    %48 = vector.shape_cast %47 : vector<2xf32> to vector<2x1xf32>
    %49 = math.log %48 : vector<2x1xf32>
    %50 = vector.broadcast %49 : vector<2x1xf32> to vector<2x16xf32>
    %51 = arith.subf %45, %50 : vector<2x16xf32>
    %c0_26 = arith.constant 0 : index
    %c0_27 = arith.constant 0 : index
    %52 = vector.load %arg8[%c0_26, %c0_27] : memref<2x16xf32, #tpu.memory_space<vmem>>, vector<2x16xf32>
    tpu.vector_store %arg8[%c0_26, %c0_27], %51 {strides = array<i32>} : memref<2x16xf32, #tpu.memory_space<vmem>>, vector<2x16xf32>,
    return
  }
  func.func @transform_0(%arg0: i32) -> (i32, i32, i32) {
    %c0_i32 = arith.constant 0 : i32
    %c0_i32_0 = arith.constant 0 : i32
    %c0_i32_1 = arith.constant 0 : i32
    return %arg0, %c0_i32, %c0_i32_0 : i32, i32, i32
  }
  func.func @transform_1(%arg0: i32) -> (i32, i32, i32) {
    %c0_i32 = arith.constant 0 : i32
    %c0_i32_0 = arith.constant 0 : i32
    %c0_i32_1 = arith.constant 0 : i32
    return %arg0, %c0_i32, %c0_i32_0 : i32, i32, i32
  }
  func.func @transform_2(%arg0: i32) -> (i32, i32) {
    %c0_i32 = arith.constant 0 : i32
    %c0_i32_0 = arith.constant 0 : i32
    return %arg0, %c0_i32 : i32, i32
  }
  func.func @transform_3(%arg0: i32) -> (i32, i32) {
    %c0_i32 = arith.constant 0 : i32
    %c0_i32_0 = arith.constant 0 : i32
    %c0_i32_1 = arith.constant 0 : i32
    return %c0_i32, %c0_i32_0 : i32, i32
  }
  func.func @transform_4(%arg0: i32) -> (i32, i32) {
    %c0_i32 = arith.constant 0 : i32
    %c0_i32_0 = arith.constant 0 : i32
    %c0_i32_1 = arith.constant 0 : i32
    return %c0_i32, %c0_i32_0 : i32, i32
  }
  func.func @transform_5(%arg0: i32) -> (i32, i32) {
    %c0_i32 = arith.constant 0 : i32
    %c0_i32_0 = arith.constant 0 : i32
    %c0_i32_1 = arith.constant 0 : i32
    return %c0_i32, %c0_i32_0 : i32, i32
  }
  func.func @transform_6(%arg0: i32) -> (i32, i32) {
    %c0_i32 = arith.constant 0 : i32
    %c0_i32_0 = arith.constant 0 : i32
    %c0_i32_1 = arith.constant 0 : i32
    return %c0_i32, %c0_i32_0 : i32, i32
  }
  func.func @transform_7(%arg0: i32) -> (i32, i32) {
    %c0_i32 = arith.constant 0 : i32
    %c0_i32_0 = arith.constant 0 : i32
    return %arg0, %c0_i32 : i32, i32
  }
}

</mosaic_0001>

<llo_original>
// kernel: tpu_custom_call.1
$region0: #{tpu_custom_call.1}
  #allocation0 [shape = 'u32[]', space=smem, size = 0x4, offset = 0x4, fixed_abs, tag = 'smem constant byte address 0x4 - core index']
  #allocation1 [shape = 'u32[144,128]{1,0:T(1,128)}', space=vmem, size = 0x12000, scoped, tag = 'internal scratch']
  %s0 = inlined_call_operand.vmem [shape: f32[2,8,32], index: 0, kind: input, shape index: {}]
  %s1 = inlined_call_operand.vmem [shape: f32[2,8,32], index: 1, kind: input, shape index: {}]
  %s2 = inlined_call_operand.vmem [shape: f32[2,32], index: 2, kind: input, shape index: {}]
  %s3 = inlined_call_operand.vmem [shape: f32[96,32], index: 3, kind: input, shape index: {}]
  %s4 = inlined_call_operand.vmem [shape: f32[1,32], index: 4, kind: input, shape index: {}]
  %s5 = inlined_call_operand.vmem [shape: f32[32,16], index: 5, kind: input, shape index: {}]
  %s6 = inlined_call_operand.vmem [shape: f32[1,16], index: 6, kind: input, shape index: {}]
  %s7 = inlined_call_operand.hbm [shape: f32[2,16], index: 7, kind: output, shape index: {}]
  %s8 = sld [smem:[#allocation0]]
  $region38: #{tpu_custom_call.1} parent=0
    _
  %s10 = ssub.s32 1, %s8
  %s11 = scalar_select 0, %s10, %s8
  $region1: #{tpu_custom_call.1} parent=0
    #allocation2 [shape = 'u8[1024]{0}', space=vmem, size = 0x400, scoped, tag = 'output window, operand 0, single buffered']
    #allocation3 [shape = 's32[1]{0}', space=sflag, size = 0x4, scoped, tag = 'scoped memory for tpu_custom_call.1']
    %12 = vsyncpa [#allocation3], 0
    // Predicated region
    $region2: #{tpu_custom_call.1} parent=1 // pred_check
      _
    $region3: #{tpu_custom_call.1} parent=1 // pred_check_branch
      %14 = sbr.rel (0) target = $region5
    $region4: #{tpu_custom_call.1} parent=1 // pred_region
      _
    $region5: #{tpu_custom_call.1} parent=1 // pred_fallthru
      _
    // Predicated region
    $region6: #{tpu_custom_call.1} parent=1 // pred_check
      _
    $region7: #{tpu_custom_call.1} parent=1 // pred_check_branch
      %16 = sbr.rel (0) target = $region9
    $region8: #{tpu_custom_call.1} parent=1 // pred_region
      _
    $region9: #{tpu_custom_call.1} parent=1 // pred_fallthru
      _
    // Predicated region
    $region10: #{tpu_custom_call.1} parent=1 // pred_check
      _
    $region11: #{tpu_custom_call.1} parent=1 // pred_check_branch
      %18 = sbr.rel (0) target = $region13
    $region12: #{tpu_custom_call.1} parent=1 // pred_region
      _
    $region13: #{tpu_custom_call.1} parent=1 // pred_fallthru
      _
    // Predicated region
    $region14: #{tpu_custom_call.1} parent=1 // pred_check
      _
    $region15: #{tpu_custom_call.1} parent=1 // pred_check_branch
      %20 = sbr.rel (0) target = $region17
    $region16: #{tpu_custom_call.1} parent=1 // pred_region
      _
    $region17: #{tpu_custom_call.1} parent=1 // pred_fallthru
      _
    // Predicated region
    $region18: #{tpu_custom_call.1} parent=1 // pred_check
      _
    $region19: #{tpu_custom_call.1} parent=1 // pred_check_branch
      %22 = sbr.rel (0) target = $region21
    $region20: #{tpu_custom_call.1} parent=1 // pred_region
      _
    $region21: #{tpu_custom_call.1} parent=1 // pred_fallthru
      _
    // Predicated region
    $region22: #{tpu_custom_call.1} parent=1 // pred_check
      _
    $region23: #{tpu_custom_call.1} parent=1 // pred_check_branch
      %24 = sbr.rel (0) target = $region25
    $region24: #{tpu_custom_call.1} parent=1 // pred_region
      _
    $region25: #{tpu_custom_call.1} parent=1 // pred_fallthru
      _
    // Predicated region
    $region26: #{tpu_custom_call.1} parent=1 // pred_check
      _
    $region27: #{tpu_custom_call.1} parent=1 // pred_check_branch
      %26 = sbr.rel (0) target = $region29
    $region28: #{tpu_custom_call.1} parent=1 // pred_region
      _
    $region29: #{tpu_custom_call.1} parent=1 // pred_fallthru
      _
    %v27 = vld [vmem:[%s0] sm:$0xff]
    %v28 = vld [vmem:[%s0 + $0x8] sm:$0xff]
    %v29 = vld [vmem:[%s1] sm:$0xff]
    %v30 = vld [vmem:[%s1 + $0x8] sm:$0xff]
    %v31 = vld [vmem:[%s2] sm:$0x3]
    %v34 = vunpack.c.l.s4 1966171168
    %v35 = vunpack.c.0.s8 %v34
    %v36 = vlaneseq
    %v37 = vshrl.u32 %v36, 7
    %v38 = vsub.s32 %v35, %v37
    %v39 = vrot.slane %v31, %v38
    %v40 = vcombine.high %v39, %v39
    %v42 = vunpack.c.l.s4 1966171168
    %v43 = vunpack.c.0.s8 %v42
    %v44 = vlaneseq
    %v45 = vshrl.u32 %v44, 7
    %v46 = vsub.s32 %v43, %v45
    %v47 = vrot.slane %v39, %v46
    %v49 = vunpack.c.l.s4 1966171168
    %v50 = vunpack.c.0.s8 %v49
    %v51 = vlaneseq
    %v52 = vshrl.u32 %v51, 7
    %v53 = vsub.s32 %v50, %v52
    %v54 = vrot.slane %v40, %v53
    %vm55 = vcmask 261120
    %v56 = vsel %vm55, %v47, 0
    %v59 = vsel %vm55, %v27, 0
    %61 = vmatprep.subr.mxu0 0.0
    %62 = vmatpush1.xpose.msra.mxu0 %v59
    %63 = vmatprep.subr.mxu0 0.0
    %64 = vmatpush1.xpose.msra.mxu0 0.0
    %65 = vmatprep.subr.mxu0 0.0
    %66 = vmatpush1.xpose.msra.mxu0 0.0
    %67 = vmatprep.subr.mxu0 0.0
    %68 = vmatpush1.xpose.msra.mxu0 0.0
    %69 = vmatprep.subr.mxu0 0.0
    %70 = vmatpush1.xpose.msra.mxu0 0.0
    %71 = vmatprep.subr.mxu0 0.0
    %72 = vmatpush1.xpose.msra.mxu0 0.0
    %73 = vmatprep.subr.mxu0 0.0
    %74 = vmatpush1.xpose.msra.mxu0 0.0
    %75 = vmatprep.subr.mxu0 0.0
    %76 = vmatpush1.xpose.msra.mxu0 0.0
    %77 = vmatprep.subr.mxu0 0.0
    %78 = vmatpush1.xpose.msra.mxu0 0.0
    %79 = vmatprep.subr.mxu0 0.0
    %80 = vmatpush1.xpose.msra.mxu0 0.0
    %81 = vmatprep.subr.mxu0 0.0
    %82 = vmatpush1.xpose.msra.mxu0 0.0
    %83 = vmatprep.subr.mxu0 0.0
    %84 = vmatpush1.xpose.msra.mxu0 0.0
    %85 = vmatprep.subr.mxu0 0.0
    %86 = vmatpush1.xpose.msra.mxu0 0.0
    %87 = vmatprep.subr.mxu0 0.0
    %88 = vmatpush1.xpose.msra.mxu0 0.0
    %89 = vmatprep.subr.mxu0 0.0
    %90 = vmatpush1.xpose.msra.mxu0 0.0
    %91 = vmatprep.subr.mxu0 0.0
    %92 = vmatpush1.xpose.msra.mxu0 0.0
    %93 = vmatprep.subr.mxu0 0.0
    %94 = vmatpush1.xpose.msra.mxu0 0.0
    %95 = vmatprep.subr.mxu0 0.0
    %96 = vmatpush1.xpose.msra.mxu0 0.0
    %97 = vmatprep.subr.mxu0 0.0
    %98 = vmatpush1.xpose.msra.mxu0 0.0
    %99 = vmatprep.subr.mxu0 0.0
    %100 = vmatpush1.xpose.msra.mxu0 0.0
    %101 = vmatprep.subr.mxu0 0.0
    %102 = vmatpush1.xpose.msra.mxu0 0.0
    %103 = vmatprep.subr.mxu0 0.0
    %104 = vmatpush1.xpose.msra.mxu0 0.0
    %105 = vmatprep.subr.mxu0 0.0
    %106 = vmatpush1.xpose.msra.mxu0 0.0
    %107 = vmatprep.subr.mxu0 0.0
    %108 = vmatpush1.xpose.msra.mxu0 0.0
    %109 = vmatprep.subr.mxu0 0.0
    %110 = vmatpush1.xpose.msra.mxu0 0.0
    %111 = vmatprep.subr.mxu0 0.0
    %112 = vmatpush1.xpose.msra.mxu0 0.0
    %113 = vmatprep.subr.mxu0 0.0
    %114 = vmatpush1.xpose.msra.mxu0 0.0
    %115 = vmatprep.subr.mxu0 0.0
    %116 = vmatpush1.xpose.msra.mxu0 0.0
    %117 = vmatprep.subr.mxu0 0.0
    %118 = vmatpush1.xpose.msra.mxu0 0.0
    %119 = vmatprep.subr.mxu0 0.0
    %120 = vmatpush1.xpose.msra.mxu0 0.0
    %121 = vmatprep.subr.mxu0 0.0
    %122 = vmatpush1.xpose.msra.mxu0 0.0
    %123 = vmatprep.subr.mxu0 0.0
    %124 = vmatpush1.xpose.msra.mxu0 0.0
    %125 = vmatprep.mubr.f32.mxu0 0.0
    %126 = vmatmul.mubr.f32.gmra.mrb[0].mxu0 %v56
    %v127 = vpop.f32.mrb[0].mxu0
    %v128 = vadd.f32 0.0, %v127
    %v129 = vpop.f32.mrb[0].mxu0
    %130 = vdwg.mxu0
    %v131 = vsel %vm55, %v54, 0
    %v134 = vsel %vm55, %v28, 0
    %136 = vmatprep.subr.mxu0 0.0
    %137 = vmatpush1.xpose.msra.mxu0 %v134
    %138 = vmatprep.subr.mxu0 0.0
    %139 = vmatpush1.xpose.msra.mxu0 0.0
    %140 = vmatprep.subr.mxu0 0.0
    %141 = vmatpush1.xpose.msra.mxu0 0.0
    %142 = vmatprep.subr.mxu0 0.0
    %143 = vmatpush1.xpose.msra.mxu0 0.0
    %144 = vmatprep.subr.mxu0 0.0
    %145 = vmatpush1.xpose.msra.mxu0 0.0
    %146 = vmatprep.subr.mxu0 0.0
    %147 = vmatpush1.xpose.msra.mxu0 0.0
    %148 = vmatprep.subr.mxu0 0.0
    %149 = vmatpush1.xpose.msra.mxu0 0.0
    %150 = vmatprep.subr.mxu0 0.0
    %151 = vmatpush1.xpose.msra.mxu0 0.0
    %152 = vmatprep.subr.mxu0 0.0
    %153 = vmatpush1.xpose.msra.mxu0 0.0
    %154 = vmatprep.subr.mxu0 0.0
    %155 = vmatpush1.xpose.msra.mxu0 0.0
    %156 = vmatprep.subr.mxu0 0.0
    %157 = vmatpush1.xpose.msra.mxu0 0.0
    %158 = vmatprep.subr.mxu0 0.0
    %159 = vmatpush1.xpose.msra.mxu0 0.0
    %160 = vmatprep.subr.mxu0 0.0
    %161 = vmatpush1.xpose.msra.mxu0 0.0
    %162 = vmatprep.subr.mxu0 0.0
    %163 = vmatpush1.xpose.msra.mxu0 0.0
    %164 = vmatprep.subr.mxu0 0.0
    %165 = vmatpush1.xpose.msra.mxu0 0.0
    %166 = vmatprep.subr.mxu0 0.0
    %167 = vmatpush1.xpose.msra.mxu0 0.0
    %168 = vmatprep.subr.mxu0 0.0
    %169 = vmatpush1.xpose.msra.mxu0 0.0
    %170 = vmatprep.subr.mxu0 0.0
    %171 = vmatpush1.xpose.msra.mxu0 0.0
    %172 = vmatprep.subr.mxu0 0.0
    %173 = vmatpush1.xpose.msra.mxu0 0.0
    %174 = vmatprep.subr.mxu0 0.0
    %175 = vmatpush1.xpose.msra.mxu0 0.0
    %176 = vmatprep.subr.mxu0 0.0
    %177 = vmatpush1.xpose.msra.mxu0 0.0
    %178 = vmatprep.subr.mxu0 0.0
    %179 = vmatpush1.xpose.msra.mxu0 0.0
    %180 = vmatprep.subr.mxu0 0.0
    %181 = vmatpush1.xpose.msra.mxu0 0.0
    %182 = vmatprep.subr.mxu0 0.0
    %183 = vmatpush1.xpose.msra.mxu0 0.0
    %184 = vmatprep.subr.mxu0 0.0
    %185 = vmatpush1.xpose.msra.mxu0 0.0
    %186 = vmatprep.subr.mxu0 0.0
    %187 = vmatpush1.xpose.msra.mxu0 0.0
    %188 = vmatprep.subr.mxu0 0.0
    %189 = vmatpush1.xpose.msra.mxu0 0.0
    %190 = vmatprep.subr.mxu0 0.0
    %191 = vmatpush1.xpose.msra.mxu0 0.0
    %192 = vmatprep.subr.mxu0 0.0
    %193 = vmatpush1.xpose.msra.mxu0 0.0
    %194 = vmatprep.subr.mxu0 0.0
    %195 = vmatpush1.xpose.msra.mxu0 0.0
    %196 = vmatprep.subr.mxu0 0.0
    %197 = vmatpush1.xpose.msra.mxu0 0.0
    %198 = vmatprep.subr.mxu0 0.0
    %199 = vmatpush1.xpose.msra.mxu0 0.0
    %200 = vmatprep.mubr.f32.mxu0 0.0
    %201 = vmatmul.mubr.f32.gmra.mrb[0].mxu0 %v131
    %v202 = vpop.f32.mrb[0].mxu0
    %v203 = vadd.f32 0.0, %v202
    %v204 = vpop.f32.mrb[0].mxu0
    %205 = vdwg.mxu0
    %vm206 = vcmask 57344
    %v207 = vsel %vm206, %v128, -inf
    %208 = vmax.xlane.f32.xlu0 %v207
    %v209 = vpop.xlane.xlu0 %208
    %v210 = vsel %vm206, %v203, -inf
    %211 = vmax.xlane.f32.xlu0 %v210
    %v212 = vpop.xlane.xlu0 %211
    %v213 = vsub.f32 %v128, %v209
    %v214 = vsub.f32 %v203, %v212
    %v215 = vmul.f32 %v213, 1.442695
    %v216 = vpow.pop %v215
    %v217 = vmul.f32 %v214, 1.442695
    %v218 = vpow.pop %v217
    %v219 = vsel %vm206, %v216, 0.0
    %220 = vadd.xlane.f32.xlu0 %v219
    %v221 = vpop.xlane.xlu0 %220
    %v222 = vsel %vm206, %v218, 0.0
    %223 = vadd.xlane.f32.xlu0 %v222
    %v224 = vpop.xlane.xlu0 %223
    %v225 = vrcp.pop %v221
    %v226 = vrcp.pop %v224
    %v227 = vmul.f32 %v216, %v225
    %v228 = vmul.f32 %v218, %v226
    %vm229 = vcmask 64512
    %v231 = vsel %vm229, %v227, 0
    %233 = vmatprep.subr.mxu0 0.0
    %234 = vmatpush1.msra.mxu0 %v27
    %235 = vmatprep.subr.mxu0 0.0
    %236 = vmatpush1.msra.mxu0 0.0
    %237 = vmatprep.subr.mxu0 0.0
    %238 = vmatpush1.msra.mxu0 0.0
    %239 = vmatprep.subr.mxu0 0.0
    %240 = vmatpush1.msra.mxu0 0.0
    %241 = vmatprep.subr.mxu0 0.0
    %242 = vmatpush1.msra.mxu0 0.0
    %243 = vmatprep.subr.mxu0 0.0
    %244 = vmatpush1.msra.mxu0 0.0
    %245 = vmatprep.subr.mxu0 0.0
    %246 = vmatpush1.msra.mxu0 0.0
    %247 = vmatprep.subr.mxu0 0.0
    %248 = vmatpush1.msra.mxu0 0.0
    %249 = vmatprep.subr.mxu0 0.0
    %250 = vmatpush1.msra.mxu0 0.0
    %251 = vmatprep.subr.mxu0 0.0
    %252 = vmatpush1.msra.mxu0 0.0
    %253 = vmatprep.subr.mxu0 0.0
    %254 = vmatpush1.msra.mxu0 0.0
    %255 = vmatprep.subr.mxu0 0.0
    %256 = vmatpush1.msra.mxu0 0.0
    %257 = vmatprep.subr.mxu0 0.0
    %258 = vmatpush1.msra.mxu0 0.0
    %259 = vmatprep.subr.mxu0 0.0
    %260 = vmatpush1.msra.mxu0 0.0
    %261 = vmatprep.subr.mxu0 0.0
    %262 = vmatpush1.msra.mxu0 0.0
    %263 = vmatprep.subr.mxu0 0.0
    %264 = vmatpush1.msra.mxu0 0.0
    %265 = vmatprep.subr.mxu0 0.0
    %266 = vmatpush1.msra.mxu0 0.0
    %267 = vmatprep.subr.mxu0 0.0
    %268 = vmatpush1.msra.mxu0 0.0
    %269 = vmatprep.subr.mxu0 0.0
    %270 = vmatpush1.msra.mxu0 0.0
    %271 = vmatprep.subr.mxu0 0.0
    %272 = vmatpush1.msra.mxu0 0.0
    %273 = vmatprep.subr.mxu0 0.0
    %274 = vmatpush1.msra.mxu0 0.0
    %275 = vmatprep.subr.mxu0 0.0
    %276 = vmatpush1.msra.mxu0 0.0
    %277 = vmatprep.subr.mxu0 0.0
    %278 = vmatpush1.msra.mxu0 0.0
    %279 = vmatprep.subr.mxu0 0.0
    %280 = vmatpush1.msra.mxu0 0.0
    %281 = vmatprep.subr.mxu0 0.0
    %282 = vmatpush1.msra.mxu0 0.0
    %283 = vmatprep.subr.mxu0 0.0
    %284 = vmatpush1.msra.mxu0 0.0
    %285 = vmatprep.subr.mxu0 0.0
    %286 = vmatpush1.msra.mxu0 0.0
    %287 = vmatprep.subr.mxu0 0.0
    %288 = vmatpush1.msra.mxu0 0.0
    %289 = vmatprep.subr.mxu0 0.0
    %290 = vmatpush1.msra.mxu0 0.0
    %291 = vmatprep.subr.mxu0 0.0
    %292 = vmatpush1.msra.mxu0 0.0
    %293 = vmatprep.subr.mxu0 0.0
    %294 = vmatpush1.msra.mxu0 0.0
    %295 = vmatprep.subr.mxu0 0.0
    %296 = vmatpush1.msra.mxu0 0.0
    %297 = vmatprep.mubr.f32.mxu0 0.0
    %298 = vmatmul.mubr.f32.gmra.mrb[0].mxu0 %v231
    %v299 = vpop.f32.mrb[0].mxu0
    %v300 = vadd.f32 0.0, %v299
    %v301 = vpop.f32.mrb[0].mxu0
    %302 = vdwg.mxu0
    %v304 = vsel %vm229, %v228, 0
    %306 = vmatprep.subr.mxu0 0.0
    %307 = vmatpush1.msra.mxu0 %v28
    %308 = vmatprep.subr.mxu0 0.0
    %309 = vmatpush1.msra.mxu0 0.0
    %310 = vmatprep.subr.mxu0 0.0
    %311 = vmatpush1.msra.mxu0 0.0
    %312 = vmatprep.subr.mxu0 0.0
    %313 = vmatpush1.msra.mxu0 0.0
    %314 = vmatprep.subr.mxu0 0.0
    %315 = vmatpush1.msra.mxu0 0.0
    %316 = vmatprep.subr.mxu0 0.0
    %317 = vmatpush1.msra.mxu0 0.0
    %318 = vmatprep.subr.mxu0 0.0
    %319 = vmatpush1.msra.mxu0 0.0
    %320 = vmatprep.subr.mxu0 0.0
    %321 = vmatpush1.msra.mxu0 0.0
    %322 = vmatprep.subr.mxu0 0.0
    %323 = vmatpush1.msra.mxu0 0.0
    %324 = vmatprep.subr.mxu0 0.0
    %325 = vmatpush1.msra.mxu0 0.0
    %326 = vmatprep.subr.mxu0 0.0
    %327 = vmatpush1.msra.mxu0 0.0
    %328 = vmatprep.subr.mxu0 0.0
    %329 = vmatpush1.msra.mxu0 0.0
    %330 = vmatprep.subr.mxu0 0.0
    %331 = vmatpush1.msra.mxu0 0.0
    %332 = vmatprep.subr.mxu0 0.0
    %333 = vmatpush1.msra.mxu0 0.0
    %334 = vmatprep.subr.mxu0 0.0
    %335 = vmatpush1.msra.mxu0 0.0
    %336 = vmatprep.subr.mxu0 0.0
    %337 = vmatpush1.msra.mxu0 0.0
    %338 = vmatprep.subr.mxu0 0.0
    %339 = vmatpush1.msra.mxu0 0.0
    %340 = vmatprep.subr.mxu0 0.0
    %341 = vmatpush1.msra.mxu0 0.0
    %342 = vmatprep.subr.mxu0 0.0
    %343 = vmatpush1.msra.mxu0 0.0
    %344 = vmatprep.subr.mxu0 0.0
    %345 = vmatpush1.msra.mxu0 0.0
    %346 = vmatprep.subr.mxu0 0.0
    %347 = vmatpush1.msra.mxu0 0.0
    %348 = vmatprep.subr.mxu0 0.0
    %349 = vmatpush1.msra.mxu0 0.0
    %350 = vmatprep.subr.mxu0 0.0
    %351 = vmatpush1.msra.mxu0 0.0
    %352 = vmatprep.subr.mxu0 0.0
    %353 = vmatpush1.msra.mxu0 0.0
    %354 = vmatprep.subr.mxu0 0.0
    %355 = vmatpush1.msra.mxu0 0.0
    %356 = vmatprep.subr.mxu0 0.0
    %357 = vmatpush1.msra.mxu0 0.0
    %358 = vmatprep.subr.mxu0 0.0
    %359 = vmatpush1.msra.mxu0 0.0
    %360 = vmatprep.subr.mxu0 0.0
    %361 = vmatpush1.msra.mxu0 0.0
    %362 = vmatprep.subr.mxu0 0.0
    %363 = vmatpush1.msra.mxu0 0.0
    %364 = vmatprep.subr.mxu0 0.0
    %365 = vmatpush1.msra.mxu0 0.0
    %366 = vmatprep.subr.mxu0 0.0
    %367 = vmatpush1.msra.mxu0 0.0
    %368 = vmatprep.subr.mxu0 0.0
    %369 = vmatpush1.msra.mxu0 0.0
    %370 = vmatprep.mubr.f32.mxu0 0.0
    %371 = vmatmul.mubr.f32.gmra.mrb[0].mxu0 %v304
    %v372 = vpop.f32.mrb[0].mxu0
    %v373 = vadd.f32 0.0, %v372
    %v374 = vpop.f32.mrb[0].mxu0
    %375 = vdwg.mxu0
    %v377 = vsel %vm55, %v29, 0
    %379 = vmatprep.subr.mxu0 0.0
    %380 = vmatpush1.xpose.msra.mxu0 %v377
    %381 = vmatprep.subr.mxu0 0.0
    %382 = vmatpush1.xpose.msra.mxu0 0.0
    %383 = vmatprep.subr.mxu0 0.0
    %384 = vmatpush1.xpose.msra.mxu0 0.0
    %385 = vmatprep.subr.mxu0 0.0
    %386 = vmatpush1.xpose.msra.mxu0 0.0
    %387 = vmatprep.subr.mxu0 0.0
    %388 = vmatpush1.xpose.msra.mxu0 0.0
    %389 = vmatprep.subr.mxu0 0.0
    %390 = vmatpush1.xpose.msra.mxu0 0.0
    %391 = vmatprep.subr.mxu0 0.0
    %392 = vmatpush1.xpose.msra.mxu0 0.0
    %393 = vmatprep.subr.mxu0 0.0
    %394 = vmatpush1.xpose.msra.mxu0 0.0
    %395 = vmatprep.subr.mxu0 0.0
    %396 = vmatpush1.xpose.msra.mxu0 0.0
    %397 = vmatprep.subr.mxu0 0.0
    %398 = vmatpush1.xpose.msra.mxu0 0.0
    %399 = vmatprep.subr.mxu0 0.0
    %400 = vmatpush1.xpose.msra.mxu0 0.0
    %401 = vmatprep.subr.mxu0 0.0
    %402 = vmatpush1.xpose.msra.mxu0 0.0
    %403 = vmatprep.subr.mxu0 0.0
    %404 = vmatpush1.xpose.msra.mxu0 0.0
    %405 = vmatprep.subr.mxu0 0.0
    %406 = vmatpush1.xpose.msra.mxu0 0.0
    %407 = vmatprep.subr.mxu0 0.0
    %408 = vmatpush1.xpose.msra.mxu0 0.0
    %409 = vmatprep.subr.mxu0 0.0
    %410 = vmatpush1.xpose.msra.mxu0 0.0
    %411 = vmatprep.subr.mxu0 0.0
    %412 = vmatpush1.xpose.msra.mxu0 0.0
    %413 = vmatprep.subr.mxu0 0.0
    %414 = vmatpush1.xpose.msra.mxu0 0.0
    %415 = vmatprep.subr.mxu0 0.0
    %416 = vmatpush1.xpose.msra.mxu0 0.0
    %417 = vmatprep.subr.mxu0 0.0
    %418 = vmatpush1.xpose.msra.mxu0 0.0
    %419 = vmatprep.subr.mxu0 0.0
    %420 = vmatpush1.xpose.msra.mxu0 0.0
    %421 = vmatprep.subr.mxu0 0.0
    %422 = vmatpush1.xpose.msra.mxu0 0.0
    %423 = vmatprep.subr.mxu0 0.0
    %424 = vmatpush1.xpose.msra.mxu0 0.0
    %425 = vmatprep.subr.mxu0 0.0
    %426 = vmatpush1.xpose.msra.mxu0 0.0
    %427 = vmatprep.subr.mxu0 0.0
    %428 = vmatpush1.xpose.msra.mxu0 0.0
    %429 = vmatprep.subr.mxu0 0.0
    %430 = vmatpush1.xpose.msra.mxu0 0.0
    %431 = vmatprep.subr.mxu0 0.0
    %432 = vmatpush1.xpose.msra.mxu0 0.0
    %433 = vmatprep.subr.mxu0 0.0
    %434 = vmatpush1.xpose.msra.mxu0 0.0
    %435 = vmatprep.subr.mxu0 0.0
    %436 = vmatpush1.xpose.msra.mxu0 0.0
    %437 = vmatprep.subr.mxu0 0.0
    %438 = vmatpush1.xpose.msra.mxu0 0.0
    %439 = vmatprep.subr.mxu0 0.0
    %440 = vmatpush1.xpose.msra.mxu0 0.0
    %441 = vmatprep.subr.mxu0 0.0
    %442 = vmatpush1.xpose.msra.mxu0 0.0
    %443 = vmatprep.mubr.f32.mxu0 0.0
    %444 = vmatmul.mubr.f32.gmra.mrb[0].mxu0 %v56
    %v445 = vpop.f32.mrb[0].mxu0
    %v446 = vadd.f32 0.0, %v445
    %v447 = vpop.f32.mrb[0].mxu0
    %448 = vdwg.mxu0
    %v450 = vsel %vm55, %v30, 0
    %452 = vmatprep.subr.mxu0 0.0
    %453 = vmatpush1.xpose.msra.mxu0 %v450
    %454 = vmatprep.subr.mxu0 0.0
    %455 = vmatpush1.xpose.msra.mxu0 0.0
    %456 = vmatprep.subr.mxu0 0.0
    %457 = vmatpush1.xpose.msra.mxu0 0.0
    %458 = vmatprep.subr.mxu0 0.0
    %459 = vmatpush1.xpose.msra.mxu0 0.0
    %460 = vmatprep.subr.mxu0 0.0
    %461 = vmatpush1.xpose.msra.mxu0 0.0
    %462 = vmatprep.subr.mxu0 0.0
    %463 = vmatpush1.xpose.msra.mxu0 0.0
    %464 = vmatprep.subr.mxu0 0.0
    %465 = vmatpush1.xpose.msra.mxu0 0.0
    %466 = vmatprep.subr.mxu0 0.0
    %467 = vmatpush1.xpose.msra.mxu0 0.0
    %468 = vmatprep.subr.mxu0 0.0
    %469 = vmatpush1.xpose.msra.mxu0 0.0
    %470 = vmatprep.subr.mxu0 0.0
    %471 = vmatpush1.xpose.msra.mxu0 0.0
    %472 = vmatprep.subr.mxu0 0.0
    %473 = vmatpush1.xpose.msra.mxu0 0.0
    %474 = vmatprep.subr.mxu0 0.0
    %475 = vmatpush1.xpose.msra.mxu0 0.0
    %476 = vmatprep.subr.mxu0 0.0
    %477 = vmatpush1.xpose.msra.mxu0 0.0
    %478 = vmatprep.subr.mxu0 0.0
    %479 = vmatpush1.xpose.msra.mxu0 0.0
    %480 = vmatprep.subr.mxu0 0.0
    %481 = vmatpush1.xpose.msra.mxu0 0.0
    %482 = vmatprep.subr.mxu0 0.0
    %483 = vmatpush1.xpose.msra.mxu0 0.0
    %484 = vmatprep.subr.mxu0 0.0
    %485 = vmatpush1.xpose.msra.mxu0 0.0
    %486 = vmatprep.subr.mxu0 0.0
    %487 = vmatpush1.xpose.msra.mxu0 0.0
    %488 = vmatprep.subr.mxu0 0.0
    %489 = vmatpush1.xpose.msra.mxu0 0.0
    %490 = vmatprep.subr.mxu0 0.0
    %491 = vmatpush1.xpose.msra.mxu0 0.0
    %492 = vmatprep.subr.mxu0 0.0
    %493 = vmatpush1.xpose.msra.mxu0 0.0
    %494 = vmatprep.subr.mxu0 0.0
    %495 = vmatpush1.xpose.msra.mxu0 0.0
    %496 = vmatprep.subr.mxu0 0.0
    %497 = vmatpush1.xpose.msra.mxu0 0.0
    %498 = vmatprep.subr.mxu0 0.0
    %499 = vmatpush1.xpose.msra.mxu0 0.0
    %500 = vmatprep.subr.mxu0 0.0
    %501 = vmatpush1.xpose.msra.mxu0 0.0
    %502 = vmatprep.subr.mxu0 0.0
    %503 = vmatpush1.xpose.msra.mxu0 0.0
    %504 = vmatprep.subr.mxu0 0.0
    %505 = vmatpush1.xpose.msra.mxu0 0.0
    %506 = vmatprep.subr.mxu0 0.0
    %507 = vmatpush1.xpose.msra.mxu0 0.0
    %508 = vmatprep.subr.mxu0 0.0
    %509 = vmatpush1.xpose.msra.mxu0 0.0
    %510 = vmatprep.subr.mxu0 0.0
    %511 = vmatpush1.xpose.msra.mxu0 0.0
    %512 = vmatprep.subr.mxu0 0.0
    %513 = vmatpush1.xpose.msra.mxu0 0.0
    %514 = vmatprep.subr.mxu0 0.0
    %515 = vmatpush1.xpose.msra.mxu0 0.0
    %516 = vmatprep.mubr.f32.mxu0 0.0
    %517 = vmatmul.mubr.f32.gmra.mrb[0].mxu0 %v131
    %v518 = vpop.f32.mrb[0].mxu0
    %v519 = vadd.f32 0.0, %v518
    %v520 = vpop.f32.mrb[0].mxu0
    %521 = vdwg.mxu0
    %v522 = vsel %vm206, %v446, -inf
    %523 = vmax.xlane.f32.xlu0 %v522
    %v524 = vpop.xlane.xlu0 %523
    %v525 = vsel %vm206, %v519, -inf
    %526 = vmax.xlane.f32.xlu0 %v525
    %v527 = vpop.xlane.xlu0 %526
    %v528 = vsub.f32 %v446, %v524
    %v529 = vsub.f32 %v519, %v527
    %v530 = vmul.f32 %v528, 1.442695
    %v531 = vpow.pop %v530
    %v532 = vmul.f32 %v529, 1.442695
    %v533 = vpow.pop %v532
    %v534 = vsel %vm206, %v531, 0.0
    %535 = vadd.xlane.f32.xlu0 %v534
    %v536 = vpop.xlane.xlu0 %535
    %v537 = vsel %vm206, %v533, 0.0
    %538 = vadd.xlane.f32.xlu0 %v537
    %v539 = vpop.xlane.xlu0 %538
    %v540 = vrcp.pop %v536
    %v541 = vrcp.pop %v539
    %v542 = vmul.f32 %v531, %v540
    %v543 = vmul.f32 %v533, %v541
    %v545 = vsel %vm229, %v542, 0
    %547 = vmatprep.subr.mxu0 0.0
    %548 = vmatpush1.msra.mxu0 %v29
    %549 = vmatprep.subr.mxu0 0.0
    %550 = vmatpush1.msra.mxu0 0.0
    %551 = vmatprep.subr.mxu0 0.0
    %552 = vmatpush1.msra.mxu0 0.0
    %553 = vmatprep.subr.mxu0 0.0
    %554 = vmatpush1.msra.mxu0 0.0
    %555 = vmatprep.subr.mxu0 0.0
    %556 = vmatpush1.msra.mxu0 0.0
    %557 = vmatprep.subr.mxu0 0.0
    %558 = vmatpush1.msra.mxu0 0.0
    %559 = vmatprep.subr.mxu0 0.0
    %560 = vmatpush1.msra.mxu0 0.0
    %561 = vmatprep.subr.mxu0 0.0
    %562 = vmatpush1.msra.mxu0 0.0
    %563 = vmatprep.subr.mxu0 0.0
    %564 = vmatpush1.msra.mxu0 0.0
    %565 = vmatprep.subr.mxu0 0.0
    %566 = vmatpush1.msra.mxu0 0.0
    %567 = vmatprep.subr.mxu0 0.0
    %568 = vmatpush1.msra.mxu0 0.0
    %569 = vmatprep.subr.mxu0 0.0
    %570 = vmatpush1.msra.mxu0 0.0
    %571 = vmatprep.subr.mxu0 0.0
    %572 = vmatpush1.msra.mxu0 0.0
    %573 = vmatprep.subr.mxu0 0.0
    %574 = vmatpush1.msra.mxu0 0.0
    %575 = vmatprep.subr.mxu0 0.0
    %576 = vmatpush1.msra.mxu0 0.0
    %577 = vmatprep.subr.mxu0 0.0
    %578 = vmatpush1.msra.mxu0 0.0
    %579 = vmatprep.subr.mxu0 0.0
    %580 = vmatpush1.msra.mxu0 0.0
    %581 = vmatprep.subr.mxu0 0.0
    %582 = vmatpush1.msra.mxu0 0.0
    %583 = vmatprep.subr.mxu0 0.0
    %584 = vmatpush1.msra.mxu0 0.0
    %585 = vmatprep.subr.mxu0 0.0
    %586 = vmatpush1.msra.mxu0 0.0
    %587 = vmatprep.subr.mxu0 0.0
    %588 = vmatpush1.msra.mxu0 0.0
    %589 = vmatprep.subr.mxu0 0.0
    %590 = vmatpush1.msra.mxu0 0.0
    %591 = vmatprep.subr.mxu0 0.0
    %592 = vmatpush1.msra.mxu0 0.0
    %593 = vmatprep.subr.mxu0 0.0
    %594 = vmatpush1.msra.mxu0 0.0
    %595 = vmatprep.subr.mxu0 0.0
    %596 = vmatpush1.msra.mxu0 0.0
    %597 = vmatprep.subr.mxu0 0.0
    %598 = vmatpush1.msra.mxu0 0.0
    %599 = vmatprep.subr.mxu0 0.0
    %600 = vmatpush1.msra.mxu0 0.0
    %601 = vmatprep.subr.mxu0 0.0
    %602 = vmatpush1.msra.mxu0 0.0
    %603 = vmatprep.subr.mxu0 0.0
    %604 = vmatpush1.msra.mxu0 0.0
    %605 = vmatprep.subr.mxu0 0.0
    %606 = vmatpush1.msra.mxu0 0.0
    %607 = vmatprep.subr.mxu0 0.0
    %608 = vmatpush1.msra.mxu0 0.0
    %609 = vmatprep.subr.mxu0 0.0
    %610 = vmatpush1.msra.mxu0 0.0
    %611 = vmatprep.mubr.f32.mxu0 0.0
    %612 = vmatmul.mubr.f32.gmra.mrb[0].mxu0 %v545
    %v613 = vpop.f32.mrb[0].mxu0
    %v614 = vadd.f32 0.0, %v613
    %v615 = vpop.f32.mrb[0].mxu0
    %616 = vdwg.mxu0
    %v618 = vsel %vm229, %v543, 0
    %620 = vmatprep.subr.mxu0 0.0
    %621 = vmatpush1.msra.mxu0 %v30
    %622 = vmatprep.subr.mxu0 0.0
    %623 = vmatpush1.msra.mxu0 0.0
    %624 = vmatprep.subr.mxu0 0.0
    %625 = vmatpush1.msra.mxu0 0.0
    %626 = vmatprep.subr.mxu0 0.0
    %627 = vmatpush1.msra.mxu0 0.0
    %628 = vmatprep.subr.mxu0 0.0
    %629 = vmatpush1.msra.mxu0 0.0
    %630 = vmatprep.subr.mxu0 0.0
    %631 = vmatpush1.msra.mxu0 0.0
    %632 = vmatprep.subr.mxu0 0.0
    %633 = vmatpush1.msra.mxu0 0.0
    %634 = vmatprep.subr.mxu0 0.0
    %635 = vmatpush1.msra.mxu0 0.0
    %636 = vmatprep.subr.mxu0 0.0
    %637 = vmatpush1.msra.mxu0 0.0
    %638 = vmatprep.subr.mxu0 0.0
    %639 = vmatpush1.msra.mxu0 0.0
    %640 = vmatprep.subr.mxu0 0.0
    %641 = vmatpush1.msra.mxu0 0.0
    %642 = vmatprep.subr.mxu0 0.0
    %643 = vmatpush1.msra.mxu0 0.0
    %644 = vmatprep.subr.mxu0 0.0
    %645 = vmatpush1.msra.mxu0 0.0
    %646 = vmatprep.subr.mxu0 0.0
    %647 = vmatpush1.msra.mxu0 0.0
    %648 = vmatprep.subr.mxu0 0.0
    %649 = vmatpush1.msra.mxu0 0.0
    %650 = vmatprep.subr.mxu0 0.0
    %651 = vmatpush1.msra.mxu0 0.0
    %652 = vmatprep.subr.mxu0 0.0
    %653 = vmatpush1.msra.mxu0 0.0
    %654 = vmatprep.subr.mxu0 0.0
    %655 = vmatpush1.msra.mxu0 0.0
    %656 = vmatprep.subr.mxu0 0.0
    %657 = vmatpush1.msra.mxu0 0.0
    %658 = vmatprep.subr.mxu0 0.0
    %659 = vmatpush1.msra.mxu0 0.0
    %660 = vmatprep.subr.mxu0 0.0
    %661 = vmatpush1.msra.mxu0 0.0
    %662 = vmatprep.subr.mxu0 0.0
    %663 = vmatpush1.msra.mxu0 0.0
    %664 = vmatprep.subr.mxu0 0.0
    %665 = vmatpush1.msra.mxu0 0.0
    %666 = vmatprep.subr.mxu0 0.0
    %667 = vmatpush1.msra.mxu0 0.0
    %668 = vmatprep.subr.mxu0 0.0
    %669 = vmatpush1.msra.mxu0 0.0
    %670 = vmatprep.subr.mxu0 0.0
    %671 = vmatpush1.msra.mxu0 0.0
    %672 = vmatprep.subr.mxu0 0.0
    %673 = vmatpush1.msra.mxu0 0.0
    %674 = vmatprep.subr.mxu0 0.0
    %675 = vmatpush1.msra.mxu0 0.0
    %676 = vmatprep.subr.mxu0 0.0
    %677 = vmatpush1.msra.mxu0 0.0
    %678 = vmatprep.subr.mxu0 0.0
    %679 = vmatpush1.msra.mxu0 0.0
    %680 = vmatprep.subr.mxu0 0.0
    %681 = vmatpush1.msra.mxu0 0.0
    %682 = vmatprep.subr.mxu0 0.0
    %683 = vmatpush1.msra.mxu0 0.0
    %684 = vmatprep.mubr.f32.mxu0 0.0
    %685 = vmatmul.mubr.f32.gmra.mrb[0].mxu0 %v618
    %v686 = vpop.f32.mrb[0].mxu0
    %v687 = vadd.f32 0.0, %v686
    %v688 = vpop.f32.mrb[0].mxu0
    %689 = vdwg.mxu0
    %v692 = vrot.slane %v373, 7
    %vm693 = vcmask 1041409
    %v694 = vsel %vm693, %v692, %v300
    %v698 = vrot.slane %v687, 7
    %v699 = vsel %vm693, %v698, %v614
    %700 = vrot.lane.b32.xlu0 %v699, 32
    %v701 = vpop.permute.xlu0 %700
    %703 = vrot.lane.b32.xlu0 %v31, 64
    %v704 = vpop.permute.xlu0 %703
    %v706 = vsel %vm55, %v694, %v701
    %vm707 = vcmask 523264
    %v708 = vsel %vm707, %v706, %v704
    %v709 = vld [vmem:[%s3] sm:$0xff]
    %v710 = vld [vmem:[%s3 + $0x8] sm:$0xff]
    %v711 = vld [vmem:[%s3 + $0x10] sm:$0xff]
    %v712 = vld [vmem:[%s3 + $0x18] sm:$0xff]
    %v713 = vld [vmem:[%s3 + $0x20] sm:$0xff]
    %v714 = vld [vmem:[%s3 + $0x28] sm:$0xff]
    %v715 = vld [vmem:[%s3 + $0x30] sm:$0xff]
    %v716 = vld [vmem:[%s3 + $0x38] sm:$0xff]
    %v717 = vld [vmem:[%s3 + $0x40] sm:$0xff]
    %v718 = vld [vmem:[%s3 + $0x48] sm:$0xff]
    %v719 = vld [vmem:[%s3 + $0x50] sm:$0xff]
    %v720 = vld [vmem:[%s3 + $0x58] sm:$0xff]
    %v721 = vld [vmem:[%s4] sm:$0x1]
    %v723 = vlaneseq
    %v724 = vshrl.u32 %v723, 7
    %v725 = vsub.s32 0, %v724
    %v726 = vrot.slane %v721, %v725
    %vm728 = vcmask 785408
    %v730 = vsel %vm728, %v708, 0
    %732 = vmatprep.subr.mxu0 0.0
    %733 = vmatpush1.msra.mxu0 %v709
    %734 = vmatprep.subr.mxu0 0.0
    %735 = vmatpush1.msra.mxu0 %v710
    %736 = vmatprep.subr.mxu0 0.0
    %737 = vmatpush1.msra.mxu0 %v711
    %738 = vmatprep.subr.mxu0 0.0
    %739 = vmatpush1.msra.mxu0 %v712
    %740 = vmatprep.subr.mxu0 0.0
    %741 = vmatpush1.msra.mxu0 %v713
    %742 = vmatprep.subr.mxu0 0.0
    %743 = vmatpush1.msra.mxu0 %v714
    %744 = vmatprep.subr.mxu0 0.0
    %745 = vmatpush1.msra.mxu0 %v715
    %746 = vmatprep.subr.mxu0 0.0
    %747 = vmatpush1.msra.mxu0 %v716
    %748 = vmatprep.subr.mxu0 0.0
    %749 = vmatpush1.msra.mxu0 %v717
    %750 = vmatprep.subr.mxu0 0.0
    %751 = vmatpush1.msra.mxu0 %v718
    %752 = vmatprep.subr.mxu0 0.0
    %753 = vmatpush1.msra.mxu0 %v719
    %754 = vmatprep.subr.mxu0 0.0
    %755 = vmatpush1.msra.mxu0 %v720
    %756 = vmatprep.subr.mxu0 0.0
    %757 = vmatpush1.msra.mxu0 0.0
    %758 = vmatprep.subr.mxu0 0.0
    %759 = vmatpush1.msra.mxu0 0.0
    %760 = vmatprep.subr.mxu0 0.0
    %761 = vmatpush1.msra.mxu0 0.0
    %762 = vmatprep.subr.mxu0 0.0
    %763 = vmatpush1.msra.mxu0 0.0
    %764 = vmatprep.subr.mxu0 0.0
    %765 = vmatpush1.msra.mxu0 0.0
    %766 = vmatprep.subr.mxu0 0.0
    %767 = vmatpush1.msra.mxu0 0.0
    %768 = vmatprep.subr.mxu0 0.0
    %769 = vmatpush1.msra.mxu0 0.0
    %770 = vmatprep.subr.mxu0 0.0
    %771 = vmatpush1.msra.mxu0 0.0
    %772 = vmatprep.subr.mxu0 0.0
    %773 = vmatpush1.msra.mxu0 0.0
    %774 = vmatprep.subr.mxu0 0.0
    %775 = vmatpush1.msra.mxu0 0.0
    %776 = vmatprep.subr.mxu0 0.0
    %777 = vmatpush1.msra.mxu0 0.0
    %778 = vmatprep.subr.mxu0 0.0
    %779 = vmatpush1.msra.mxu0 0.0
    %780 = vmatprep.subr.mxu0 0.0
    %781 = vmatpush1.msra.mxu0 0.0
    %782 = vmatprep.subr.mxu0 0.0
    %783 = vmatpush1.msra.mxu0 0.0
    %784 = vmatprep.subr.mxu0 0.0
    %785 = vmatpush1.msra.mxu0 0.0
    %786 = vmatprep.subr.mxu0 0.0
    %787 = vmatpush1.msra.mxu0 0.0
    %788 = vmatprep.subr.mxu0 0.0
    %789 = vmatpush1.msra.mxu0 0.0
    %790 = vmatprep.subr.mxu0 0.0
    %791 = vmatpush1.msra.mxu0 0.0
    %792 = vmatprep.subr.mxu0 0.0
    %793 = vmatpush1.msra.mxu0 0.0
    %794 = vmatprep.subr.mxu0 0.0
    %795 = vmatpush1.msra.mxu0 0.0
    %796 = vmatprep.mubr.f32.mxu0 0.0
    %797 = vmatmul.mubr.f32.gmra.mrb[0].mxu0 %v730
    %v798 = vpop.f32.mrb[0].mxu0
    %v799 = vadd.f32 %v726, %v798
    %v800 = vpop.f32.mrb[0].mxu0
    %801 = vdwg.mxu0
    %v802 = vtanh.pop %v799
    %v803 = vld [vmem:[%s5] sm:$0xff]
    %v804 = vld [vmem:[%s5 + $0x8] sm:$0xff]
    %v805 = vld [vmem:[%s5 + $0x10] sm:$0xff]
    %v806 = vld [vmem:[%s5 + $0x18] sm:$0xff]
    %v807 = vld [vmem:[%s6] sm:$0x1]
    %v809 = vlaneseq
    %v810 = vshrl.u32 %v809, 7
    %v811 = vsub.s32 0, %v810
    %v812 = vrot.slane %v807, %v811
    %v815 = vsel %vm55, %v802, 0
    %817 = vmatprep.subr.mxu0 0.0
    %818 = vmatpush1.msra.mxu0 %v803
    %819 = vmatprep.subr.mxu0 0.0
    %820 = vmatpush1.msra.mxu0 %v804
    %821 = vmatprep.subr.mxu0 0.0
    %822 = vmatpush1.msra.mxu0 %v805
    %823 = vmatprep.subr.mxu0 0.0
    %824 = vmatpush1.msra.mxu0 %v806
    %825 = vmatprep.subr.mxu0 0.0
    %826 = vmatpush1.msra.mxu0 0.0
    %827 = vmatprep.subr.mxu0 0.0
    %828 = vmatpush1.msra.mxu0 0.0
    %829 = vmatprep.subr.mxu0 0.0
    %830 = vmatpush1.msra.mxu0 0.0
    %831 = vmatprep.subr.mxu0 0.0
    %832 = vmatpush1.msra.mxu0 0.0
    %833 = vmatprep.subr.mxu0 0.0
    %834 = vmatpush1.msra.mxu0 0.0
    %835 = vmatprep.subr.mxu0 0.0
    %836 = vmatpush1.msra.mxu0 0.0
    %837 = vmatprep.subr.mxu0 0.0
    %838 = vmatpush1.msra.mxu0 0.0
    %839 = vmatprep.subr.mxu0 0.0
    %840 = vmatpush1.msra.mxu0 0.0
    %841 = vmatprep.subr.mxu0 0.0
    %842 = vmatpush1.msra.mxu0 0.0
    %843 = vmatprep.subr.mxu0 0.0
    %844 = vmatpush1.msra.mxu0 0.0
    %845 = vmatprep.subr.mxu0 0.0
    %846 = vmatpush1.msra.mxu0 0.0
    %847 = vmatprep.subr.mxu0 0.0
    %848 = vmatpush1.msra.mxu0 0.0
    %849 = vmatprep.subr.mxu0 0.0
    %850 = vmatpush1.msra.mxu0 0.0
    %851 = vmatprep.subr.mxu0 0.0
    %852 = vmatpush1.msra.mxu0 0.0
    %853 = vmatprep.subr.mxu0 0.0
    %854 = vmatpush1.msra.mxu0 0.0
    %855 = vmatprep.subr.mxu0 0.0
    %856 = vmatpush1.msra.mxu0 0.0
    %857 = vmatprep.subr.mxu0 0.0
    %858 = vmatpush1.msra.mxu0 0.0
    %859 = vmatprep.subr.mxu0 0.0
    %860 = vmatpush1.msra.mxu0 0.0
    %861 = vmatprep.subr.mxu0 0.0
    %862 = vmatpush1.msra.mxu0 0.0
    %863 = vmatprep.subr.mxu0 0.0
    %864 = vmatpush1.msra.mxu0 0.0
    %865 = vmatprep.subr.mxu0 0.0
    %866 = vmatpush1.msra.mxu0 0.0
    %867 = vmatprep.subr.mxu0 0.0
    %868 = vmatpush1.msra.mxu0 0.0
    %869 = vmatprep.subr.mxu0 0.0
    %870 = vmatpush1.msra.mxu0 0.0
    %871 = vmatprep.subr.mxu0 0.0
    %872 = vmatpush1.msra.mxu0 0.0
    %873 = vmatprep.subr.mxu0 0.0
    %874 = vmatpush1.msra.mxu0 0.0
    %875 = vmatprep.subr.mxu0 0.0
    %876 = vmatpush1.msra.mxu0 0.0
    %877 = vmatprep.subr.mxu0 0.0
    %878 = vmatpush1.msra.mxu0 0.0
    %879 = vmatprep.subr.mxu0 0.0
    %880 = vmatpush1.msra.mxu0 0.0
    %881 = vmatprep.mubr.f32.mxu0 0.0
    %882 = vmatmul.mubr.f32.gmra.mrb[0].mxu0 %v815
    %v883 = vpop.f32.mrb[0].mxu0
    %v884 = vadd.f32 %v812, %v883
    %v885 = vpop.f32.mrb[0].mxu0
    %886 = vdwg.mxu0
    %vm887 = vcmask 123904
    %v888 = vsel %vm887, %v884, -inf
    %889 = vmax.xlane.f32.xlu0 %v888
    %v890 = vpop.xlane.xlu0 %889
    %v891 = vsub.f32 %v884, %v890
    %v892 = vmul.f32 %v891, 1.442695
    %v893 = vpow.pop %v892
    %v894 = vsel %vm887, %v893, 0.0
    %895 = vadd.xlane.f32.xlu0 %v894
    %v896 = vpop.xlane.xlu0 %895
    %v897 = vlog2.pop %v896
    %v898 = vmul.f32 %v897, 0.6931472
    %v899 = vsub.f32 %v891, %v898
    %900 = vst.msk [vmem:[#allocation2] sm:$0x3] %vm887, %v899
    // Predicated region
    $region30: #{tpu_custom_call.1} parent=1 // pred_check
      _
    $region31: #{tpu_custom_call.1} parent=1 // pred_check_branch
      %902 = sbr.rel (0) target = $region33
    $region32: #{tpu_custom_call.1} parent=1 // pred_region
      %s904 = ssub.s32 32, 32
      %905 = vsyncadd [#allocation3], %s904
      %s907 = sshll.u32 [#allocation2], 4
      %s908 = int_to_ptr.vmem [resolvable:$true] %s907
      %910 = dma.vmem_to_hbm [thread:$0]  %s908, 32, %s7, [#allocation3]
    $region33: #{tpu_custom_call.1} parent=1 // pred_fallthru
      _
    // Predicated region
    $region34: #{tpu_custom_call.1} parent=1 // pred_check
      _
    $region35: #{tpu_custom_call.1} parent=1 // pred_check_branch
      %912 = sbr.rel (0) target = $region37
    $region36: #{tpu_custom_call.1} parent=1 // pred_region
      %913 = dma.done [#allocation3], 32
    $region37: #{tpu_custom_call.1} parent=1 // pred_fallthru
      _
    %914 = vsyncpa [#allocation3], 1

</llo_original>
